<compile_context>
chip_gen: v7x
topology: tpu7x:2x2x1
jax: 0.10.0
libtpu: 0.0.40
codegen_flags: <defaults>
</compile_context>

<pallas_src>
import math

import jax
import jax.numpy as jnp
from jax.experimental import pallas as pl
from jax.experimental.pallas import tpu as pltpu

# Rows of the resident [4, hidden] constants table.
_ROW_FREQS, _ROW_PHASE, _ROW_B1, _ROW_B2 = 0, 1, 2, 3


def time_embed_kernel(t_ref, tab_ref, w1_ref, w2_ref, o_ref):
    # t_ref:   [TN, 1]          f32  (pipelined tile)
    # tab_ref: [4, hidden]      f32  (resident: freqs_full / phase / b1 / b2 rows)
    # w1_ref:  [hidden, hidden] bf16 (resident, already [in, out])
    # w2_ref:  [hidden, hidden] bf16 (resident, already [in, out])
    # o_ref:   [TN, hidden]     f32
    t = t_ref[...]                                            # [TN, 1]
    freqs = tab_ref[_ROW_FREQS:_ROW_FREQS + 1, :]             # [1, hidden]
    phase = tab_ref[_ROW_PHASE:_ROW_PHASE + 1, :]
    b1 = tab_ref[_ROW_B1:_ROW_B1 + 1, :]
    b2 = tab_ref[_ROW_B2:_ROW_B2 + 1, :]

    # Sinusoidal embedding without a lane-axis concat: cos(x) = sin(x + pi/2).
    emb = jnp.sin(t * freqs + phase)                          # [TN, hidden] f32 (VPU + EUP)

    # Linear 1: bf16 operands -> MXU, f32 accumulate; bias + SiLU in f32.
    h = jnp.dot(emb.astype(w1_ref.dtype), w1_ref[...],
                preferred_element_type=jnp.float32) + b1
    h = h * jax.nn.sigmoid(h)                                 # SiLU (f32, EUP)

    # Linear 2.
    out = jnp.dot(h.astype(w2_ref.dtype), w2_ref[...],
                  preferred_element_type=jnp.float32) + b2
    o_ref[...] = out.astype(o_ref.dtype)


def prepare_params(torch_style_params, hidden_dim, max_period=10000.0):
    """One-time conversion of PyTorch-layout f32 params to kernel params.

    torch_style_params: {"w1": [out,in], "b1": [out], "w2": [out,in], "b2": [out]} (f32)
    Returns pre-transposed bf16 weights plus a packed [4, hidden] f32 table
    (freqs_full / phase / b1 / b2), so the hot-path wrapper does no transpose or
    exp(arange) work per call.
    """
    assert hidden_dim % 2 == 0, "kernel assumes even hidden_dim"
    # TODO(synk): odd hidden_dim would need a zero-pad column appended to the embedding.
    half = hidden_dim // 2
    freqs = jnp.exp(-math.log(max_period) * jnp.arange(half, dtype=jnp.float32) / half)
    freqs_full = jnp.concatenate([freqs, freqs])                       # [hidden]
    phase = jnp.concatenate([
        jnp.full((half,), jnp.pi / 2, dtype=jnp.float32),              # cos half
        jnp.zeros((half,), dtype=jnp.float32),                          # sin half
    ])
    table = jnp.stack([
        freqs_full,
        phase,
        torch_style_params["b1"].astype(jnp.float32),
        torch_style_params["b2"].astype(jnp.float32),
    ]).reshape(4, hidden_dim)
    return {
        "w1": torch_style_params["w1"].T.astype(jnp.bfloat16),         # [in, out]
        "w2": torch_style_params["w2"].T.astype(jnp.bfloat16),
        "table": table,                                                 # [4, hidden] f32
    }


def time_embedding_forward(t, kparams, *, block_rows=512):
    """t: [N] (or [N, 1]) float timesteps. Returns [N, hidden_dim] float32."""
    hidden = kparams["w1"].shape[0]
    t2d = jnp.asarray(t, jnp.float32).reshape(-1, 1)
    n = t2d.shape[0]
    # Rows per grid step: multiple of 8 (sublane), capped at block_rows.
    tn = min(block_rows, max(8, pl.cdiv(n, 8) * 8))
    grid = (pl.cdiv(n, tn),)

    def tiled(cols):
        return pl.BlockSpec((tn, cols), lambda i: (i, 0))

    def resident(shape):
        return pl.BlockSpec(shape, lambda i: (0, 0))

    # VMEM budget (double-buffered allocations) + headroom; only raise the scoped
    # limit above the 32 MiB default when the problem actually needs it.
    w_bytes = 2 * hidden * hidden * 2 * 2            # two bf16 weights, x2 buffers
    tab_bytes = 4 * hidden * 4 * 2                   # constants table, x2 buffers
    io_bytes = 2 * (tn * 4) + 2 * (tn * hidden * 4)  # t and out tiles, double-buffered
    act_bytes = 4 * tn * hidden * 4                  # in-kernel f32 intermediates
    budget = w_bytes + tab_bytes + io_bytes + act_bytes + (4 << 20)
    vmem_limit = int(min(max(budget, 32 << 20), 100 << 20))

    cost = pl.CostEstimate(
        flops=4 * n * hidden * hidden,               # two [n,h]x[h,h] matmuls
        transcendentals=2 * n * hidden,              # sin + sigmoid
        bytes_accessed=(n * 4 + n * hidden * 4
                        + 2 * hidden * hidden * 2 + 4 * hidden * 4),
    )

    return pl.pallas_call(
        time_embed_kernel,
        out_shape=jax.ShapeDtypeStruct((n, hidden), jnp.float32),
        grid=grid,
        in_specs=[
            tiled(1),                      # t       (pipelined)
            resident((4, hidden)),         # freqs / phase / b1 / b2 (resident)
            resident((hidden, hidden)),    # w1      (resident)
            resident((hidden, hidden)),    # w2      (resident)
        ],
        out_specs=tiled(hidden),
        compiler_params=pltpu.CompilerParams(
            dimension_semantics=("parallel",),
            vmem_limit_bytes=vmem_limit,
        ),
        cost_estimate=cost,
    )(t2d, kparams["table"], kparams["w1"], kparams["w2"])


def init_torch_style_params(key, hidden_dim):
    """Master params in PyTorch nn.Linear layout: W is [out, in], f32."""
    k1, k2, k3, k4 = jax.random.split(key, 4)
    bound = 1.0 / math.sqrt(hidden_dim)
    return {
        "w1": jax.random.uniform(k1, (hidden_dim, hidden_dim), jnp.float32, -bound, bound),
        "b1": jax.random.uniform(k2, (hidden_dim,), jnp.float32, -bound, bound),
        "w2": jax.random.uniform(k3, (hidden_dim, hidden_dim), jnp.float32, -bound, bound),
        "b2": jax.random.uniform(k4, (hidden_dim,), jnp.float32, -bound, bound),
    }


def reference_forward(t, kparams, max_period=10000.0):
    """Pure-JAX reference: faithful cos/sin-concat embedding, same bf16-MXU numerics."""
    hidden = kparams["w1"].shape[0]
    half = hidden // 2
    freqs = jnp.exp(-math.log(max_period) * jnp.arange(half, dtype=jnp.float32) / half)
    args = jnp.asarray(t, jnp.float32).reshape(-1, 1) * freqs[None]
    emb = jnp.concatenate([jnp.cos(args), jnp.sin(args)], axis=-1)
    b1 = kparams["table"][_ROW_B1]
    b2 = kparams["table"][_ROW_B2]
    h = jnp.dot(emb.astype(jnp.bfloat16), kparams["w1"],
                preferred_element_type=jnp.float32) + b1
    h = h * jax.nn.sigmoid(h)
    return jnp.dot(h.astype(jnp.bfloat16), kparams["w2"],
                   preferred_element_type=jnp.float32) + b2


if __name__ == "__main__":
    hidden_dim = 32
    batch = 8

    key = jax.random.PRNGKey(0)
    kp, kt = jax.random.split(key)
    master = init_torch_style_params(kp, hidden_dim)
    kparams = prepare_params(master, hidden_dim)   # one-time prep, outside the hot path

    # Timesteps: small positive floats (as in diffusion sampling schedules).
    t = jax.random.uniform(kt, (batch,), jnp.float32, 0.0, 1000.0)

    out = jax.block_until_ready(time_embedding_forward(t, kparams))

    ref = reference_forward(t, kparams)
    assert out.shape == (batch, hidden_dim)
    # Loose-ish tolerance: kernel uses sin(x + pi/2) for cos and bf16 MXU operands.
    assert jnp.allclose(out, ref, atol=1e-2, rtol=1e-2), "mismatch vs reference"

    print("KERNEL_OK")
</pallas_src>

<mosaic_0001>
module attributes {stable_mosaic.version = 11 : i64} {
  func.func @time_embed_kernel(%arg0: i32, %arg1: memref<8x1xf32, #tpu.memory_space<vmem>>, %arg2: memref<4x32xf32, #tpu.memory_space<vmem>>, %arg3: memref<32x32xbf16, #tpu.memory_space<vmem>>, %arg4: memref<32x32xbf16, #tpu.memory_space<vmem>>, %arg5: memref<8x32xf32, #tpu.memory_space<vmem>>) attributes {dimension_semantics = [#tpu.dimension_semantics<parallel>], iteration_bounds = array<i64: 1>, scalar_prefetch = 0 : i64, scratch_operands = 0 : i64, tpu.core_type = #tpu.core_type<tc>, window_params = [{transform_indices = @transform_0, window_bounds = array<i64: 8, 1>}, {pipeline_mode = #tpu.pipeline_mode<synchronous>, transform_indices = @transform_1, window_bounds = array<i64: 4, 32>}, {pipeline_mode = #tpu.pipeline_mode<synchronous>, transform_indices = @transform_2, window_bounds = array<i64: 32, 32>}, {pipeline_mode = #tpu.pipeline_mode<synchronous>, transform_indices = @transform_3, window_bounds = array<i64: 32, 32>}, {transform_indices = @transform_4, window_bounds = array<i64: 8, 32>}]} {
    %c0 = arith.constant 0 : index
    %c0_0 = arith.constant 0 : index
    %0 = vector.load %arg1[%c0, %c0_0] : memref<8x1xf32, #tpu.memory_space<vmem>>, vector<8x1xf32>
    %c0_1 = arith.constant 0 : index
    %c0_2 = arith.constant 0 : index
    %1 = vector.load %arg2[%c0_1, %c0_2] : memref<4x32xf32, #tpu.memory_space<vmem>>, vector<1x32xf32>
    %c1 = arith.constant 1 : index
    %c0_3 = arith.constant 0 : index
    %2 = vector.load %arg2[%c1, %c0_3] : memref<4x32xf32, #tpu.memory_space<vmem>>, vector<1x32xf32>
    %c2 = arith.constant 2 : index
    %c0_4 = arith.constant 0 : index
    %3 = vector.load %arg2[%c2, %c0_4] : memref<4x32xf32, #tpu.memory_space<vmem>>, vector<1x32xf32>
    %c3 = arith.constant 3 : index
    %c0_5 = arith.constant 0 : index
    %4 = vector.load %arg2[%c3, %c0_5] : memref<4x32xf32, #tpu.memory_space<vmem>>, vector<1x32xf32>
    %5 = vector.broadcast %0 : vector<8x1xf32> to vector<8x32xf32>
    %6 = vector.broadcast %1 : vector<1x32xf32> to vector<8x32xf32>
    %7 = arith.mulf %5, %6 : vector<8x32xf32>
    %8 = vector.broadcast %2 : vector<1x32xf32> to vector<8x32xf32>
    %9 = arith.addf %7, %8 : vector<8x32xf32>
    %10 = math.sin %9 : vector<8x32xf32>
    %11 = arith.truncf %10 : vector<8x32xf32> to vector<8x32xbf16>
    %c0_6 = arith.constant 0 : index
    %c0_7 = arith.constant 0 : index
    %12 = vector.load %arg3[%c0_6, %c0_7] : memref<32x32xbf16, #tpu.memory_space<vmem>>, vector<32x32xbf16>
    %cst = arith.constant dense<0.000000e+00> : vector<8x32xf32>
    %13 = tpu.matmul %11, %12, %cst {dimension_numbers = #tpu.dot_dimension_numbers<[1], [0], [0], [1], [0, 0, 1, 1], [], []>} : vector<8x32xbf16>, vector<32x32xbf16>, vector<8x32xf32> -> vector<8x32xf32>
    %14 = vector.broadcast %3 : vector<1x32xf32> to vector<8x32xf32>
    %15 = arith.addf %13, %14 : vector<8x32xf32>
    %16 = arith.negf %15 : vector<8x32xf32>
    %17 = math.exp %16 : vector<8x32xf32>
    %cst_8 = arith.constant 1.000000e+00 : f32
    %18 = vector.broadcast %cst_8 : f32 to vector<8x32xf32>
    %19 = arith.addf %18, %17 : vector<8x32xf32>
    %20 = arith.divf %18, %19 : vector<8x32xf32>
    %21 = arith.mulf %15, %20 : vector<8x32xf32>
    %22 = arith.truncf %21 : vector<8x32xf32> to vector<8x32xbf16>
    %c0_9 = arith.constant 0 : index
    %c0_10 = arith.constant 0 : index
    %23 = vector.load %arg4[%c0_9, %c0_10] : memref<32x32xbf16, #tpu.memory_space<vmem>>, vector<32x32xbf16>
    %cst_11 = arith.constant dense<0.000000e+00> : vector<8x32xf32>
    %24 = tpu.matmul %22, %23, %cst_11 {dimension_numbers = #tpu.dot_dimension_numbers<[1], [0], [0], [1], [0, 0, 1, 1], [], []>} : vector<8x32xbf16>, vector<32x32xbf16>, vector<8x32xf32> -> vector<8x32xf32>
    %25 = vector.broadcast %4 : vector<1x32xf32> to vector<8x32xf32>
    %26 = arith.addf %24, %25 : vector<8x32xf32>
    %c0_12 = arith.constant 0 : index
    %c0_13 = arith.constant 0 : index
    %27 = vector.load %arg5[%c0_12, %c0_13] : memref<8x32xf32, #tpu.memory_space<vmem>>, vector<8x32xf32>
    tpu.vector_store %arg5[%c0_12, %c0_13], %26 {strides = array<i32>} : memref<8x32xf32, #tpu.memory_space<vmem>>, vector<8x32xf32>,
    return
  }
  func.func @transform_0(%arg0: i32) -> (i32, i32) {
    %c0_i32 = arith.constant 0 : i32
    %c0_i32_0 = arith.constant 0 : i32
    return %arg0, %c0_i32 : i32, i32
  }
  func.func @transform_1(%arg0: i32) -> (i32, i32) {
    %c0_i32 = arith.constant 0 : i32
    %c0_i32_0 = arith.constant 0 : i32
    %c0_i32_1 = arith.constant 0 : i32
    return %c0_i32, %c0_i32_0 : i32, i32
  }
  func.func @transform_2(%arg0: i32) -> (i32, i32) {
    %c0_i32 = arith.constant 0 : i32
    %c0_i32_0 = arith.constant 0 : i32
    %c0_i32_1 = arith.constant 0 : i32
    return %c0_i32, %c0_i32_0 : i32, i32
  }
  func.func @transform_3(%arg0: i32) -> (i32, i32) {
    %c0_i32 = arith.constant 0 : i32
    %c0_i32_0 = arith.constant 0 : i32
    %c0_i32_1 = arith.constant 0 : i32
    return %c0_i32, %c0_i32_0 : i32, i32
  }
  func.func @transform_4(%arg0: i32) -> (i32, i32) {
    %c0_i32 = arith.constant 0 : i32
    %c0_i32_0 = arith.constant 0 : i32
    return %arg0, %c0_i32 : i32, i32
  }
}

</mosaic_0001>

<llo_original>
// kernel: tpu_custom_call.1
$region0: #{tpu_custom_call.1}
  #allocation0 [shape = 'u32[]', space=smem, size = 0x4, offset = 0x4, fixed_abs, tag = 'smem constant byte address 0x4 - core index']
  #allocation1 [shape = 'u32[144,128]{1,0:T(1,128)}', space=vmem, size = 0x12000, scoped, tag = 'internal scratch']
  %s0 = inlined_call_operand.vmem [shape: f32[8,1], index: 0, kind: input, shape index: {}]
  %s1 = inlined_call_operand.hbm [shape: f32[4,32], index: 1, kind: input, shape index: {}]
  %s2 = inlined_call_operand.vmem [shape: bf16[32,32], index: 2, kind: input, shape index: {}]
  %s3 = inlined_call_operand.hbm [shape: bf16[32,32], index: 3, kind: input, shape index: {}]
  %s4 = inlined_call_operand.hbm [shape: f32[8,32], index: 4, kind: output, shape index: {}]
  %s5 = sld [smem:[#allocation0]]
  $region34: #{tpu_custom_call.1} parent=0
    _
  %s7 = ssub.s32 1, %s5
  %s8 = scalar_select 0, %s7, %s5
  $region1: #{tpu_custom_call.1} parent=0
    #allocation2 [shape = 'u8[2048]{0}', space=vmem, size = 0x800, scoped, tag = 'input window, operand 1, single buffered']
    #allocation3 [shape = 's32[1]{0}', space=sflag, size = 0x4, scoped, tag = 'scoped memory for tpu_custom_call.1']
    #allocation4 [shape = 's32[1]{0}', space=sflag, size = 0x4, scoped, tag = 'scoped memory for tpu_custom_call.1']
    #allocation5 [shape = 'u8[8192]{0}', space=vmem, size = 0x2000, scoped, tag = 'input window, operand 3, single buffered']
    #allocation6 [shape = 's32[1]{0}', space=sflag, size = 0x4, scoped, tag = 'scoped memory for tpu_custom_call.1']
    #allocation7 [shape = 'u8[4096]{0}', space=vmem, size = 0x1000, scoped, tag = 'output window, operand 0, single buffered']
    %9 = vsyncpa [#allocation3], 0
    %10 = vsyncpa [#allocation6], 0
    %11 = vsyncpa [#allocation4], 0
    // Predicated region
    $region2: #{tpu_custom_call.1} parent=1 // pred_check
      _
    $region3: #{tpu_custom_call.1} parent=1 // pred_check_branch
      %13 = sbr.rel (0) target = $region5
    $region4: #{tpu_custom_call.1} parent=1 // pred_region
      _
    $region5: #{tpu_custom_call.1} parent=1 // pred_fallthru
      _
    // Predicated region
    $region6: #{tpu_custom_call.1} parent=1 // pred_check
      _
    $region7: #{tpu_custom_call.1} parent=1 // pred_check_branch
      %15 = sbr.rel (0) target = $region9
    $region8: #{tpu_custom_call.1} parent=1 // pred_region
      %s17 = ssub.s32 64, 64
      %18 = vsyncadd [#allocation3], %s17
      %s20 = sshll.u32 [#allocation2], 4
      %s21 = int_to_ptr.vmem [resolvable:$true] %s20
      %23 = dma.hbm_to_vmem [thread:$0]  %s1, 64, %s21, [#allocation3]
    $region9: #{tpu_custom_call.1} parent=1 // pred_fallthru
      _
    // Predicated region
    $region10: #{tpu_custom_call.1} parent=1 // pred_check
      _
    $region11: #{tpu_custom_call.1} parent=1 // pred_check_branch
      %25 = sbr.rel (0) target = $region13
    $region12: #{tpu_custom_call.1} parent=1 // pred_region
      _
    $region13: #{tpu_custom_call.1} parent=1 // pred_fallthru
      _
    // Predicated region
    $region14: #{tpu_custom_call.1} parent=1 // pred_check
      _
    $region15: #{tpu_custom_call.1} parent=1 // pred_check_branch
      %27 = sbr.rel (0) target = $region17
    $region16: #{tpu_custom_call.1} parent=1 // pred_region
      %s29 = ssub.s32 256, 256
      %30 = vsyncadd [#allocation6], %s29
      %s31 = sshll.u32 [#allocation5], 4
      %s32 = int_to_ptr.vmem [resolvable:$true] %s31
      %37 = dma.hbm_to_vmem [thread:$0]  %s3, 256, %s32, [#allocation6], 64, 64, 4
    $region17: #{tpu_custom_call.1} parent=1 // pred_fallthru
      _
    // Predicated region
    $region18: #{tpu_custom_call.1} parent=1 // pred_check
      _
    $region19: #{tpu_custom_call.1} parent=1 // pred_check_branch
      %39 = sbr.rel (0) target = $region21
    $region20: #{tpu_custom_call.1} parent=1 // pred_region
      %40 = dma.done [#allocation3], 64
    $region21: #{tpu_custom_call.1} parent=1 // pred_fallthru
      _
    // Predicated region
    $region22: #{tpu_custom_call.1} parent=1 // pred_check
      _
    $region23: #{tpu_custom_call.1} parent=1 // pred_check_branch
      %42 = sbr.rel (0) target = $region25
    $region24: #{tpu_custom_call.1} parent=1 // pred_region
      %43 = dma.done [#allocation6], 256
    $region25: #{tpu_custom_call.1} parent=1 // pred_fallthru
      _
    %v45 = vld [vmem:[%s0] sm:$0xff]
    %v46 = vld [vmem:[#allocation2] sm:$0x1]
    %v47 = vld [vmem:[#allocation2 + $0x1] sm:$0x1]
    %v48 = vld [vmem:[#allocation2 + $0x2] sm:$0x1]
    %v49 = vld [vmem:[#allocation2 + $0x3] sm:$0x1]
    %51 = vset.pattern.permute.xlu0 0
    %52 = vperm.xlu0 %51, %v45
    %v53 = vpop.permute.xlu0 %52
    %v55 = vlaneseq
    %v56 = vshrl.u32 %v55, 7
    %v57 = vsub.s32 0, %v56
    %v58 = vrot.slane %v46, %v57
    %v59 = vmul.f32 %v53, %v58
    %v60 = vlaneseq
    %v61 = vshrl.u32 %v60, 7
    %v62 = vsub.s32 0, %v61
    %v63 = vrot.slane %v47, %v62
    %v64 = vadd.f32 %v59, %v63
    %v65 = vand.u32 2147483647, %v64
    %vm66 = vcmp.le.f32.partialorder %v65, 0.7853982
    %vm67 = vcmp.lt.s32.totalorder %v64, 0
    %v68 = vand.u32 %v64, 2139095040
    %v69 = vshrl.u32 %v68, 23
    %v70 = vsub.s32 %v69, 127
    %v71 = vand.u32 2147483647, %v64
    %v72 = vand.u32 %v71, 8388607
    %v73 = vor.u32 %v72, 8388608
    %v74 = vsub.s32 0, %v73
    %v75 = vadd.s32 %v70, 1
    %vm76 = vcmp.gt.s32.totalorder %v75, 0
    %v77 = vsel %vm76, %v75, 0
    %v78 = vshrl.u32 %v77, 5
    %v79 = vand.u32 %v77, 31
    %v80 = vsub.s32 32, %v79
    %v81 = vshrl.u32 683565275, %v80
    %v82 = vshll.u32 683565275, %v79
    %v83 = vshrl.u32 2475754826, %v80
    %v84 = vor.u32 %v82, %v83
    %v85 = vshll.u32 2475754826, %v79
    %v86 = vshrl.u32 2131351028, %v80
    %v87 = vor.u32 %v85, %v86
    %v88 = vshll.u32 2131351028, %v79
    %v89 = vshrl.u32 2102212464, %v80
    %v90 = vor.u32 %v88, %v89
    %v91 = vshll.u32 2102212464, %v79
    %v92 = vshrl.u32 920167782, %v80
    %v93 = vor.u32 %v91, %v92
    %v94 = vshll.u32 920167782, %v79
    %v95 = vshrl.u32 1326507024, %v80
    %v96 = vor.u32 %v94, %v95
    %vm97 = vcmp.lt.s32.totalorder %v78, 1
    %vm98 = vcmp.lt.s32.totalorder %v78, 2
    %vm99 = vcmp.lt.s32.totalorder %v78, 3
    %vm100 = vcmp.lt.s32.totalorder %v78, 4
    %v101 = vsel %vm97, %v81, %v84
    %v102 = vsel %vm100, %v90, 2102212464
    %v103 = vsel %vm99, %v87, %v102
    %v104 = vsel %vm98, %v101, %v103
    %v105 = vsel %vm97, %v84, %v87
    %v106 = vsel %vm100, %v93, 920167782
    %v107 = vsel %vm99, %v90, %v106
    %v108 = vsel %vm98, %v105, %v107
    %v109 = vsel %vm97, %v87, %v90
    %v110 = vsel %vm100, %v96, 1326507024
    %v111 = vsel %vm99, %v93, %v110
    %v112 = vsel %vm98, %v109, %v111
    %v113 = vshll.u32 %v73, 8
    %v114 = vmul.u32.u64.compose %v113, %v112
    %v115 = vextract.low.u32 %v114
    %v116 = vextract.high.u32 %v114
    %v117 = vmul.u32.u64.compose %v113, %v108
    %v118 = vextract.low.u32 %v117
    %v119 = vextract.high.u32 %v117
    %v120 = vmul.u32 %v113, %v104
    %v121 = vadd.s32 %v116, %v118
    %vm122 = vc.u32 %v116, %v118
    %v123 = vadd.s32 %v119, 1
    %v124 = vsel %vm122, %v123, %v119
    %v125 = vadd.s32 %v120, %v124
    %v126 = vadd.s32 %v125, 536870912
    %v127 = vshrl.u32 %v126, 30
    %v128 = vshll.u32 %v127, 30
    %v129 = vsub.s32 %v125, %v128
    %vm130 = vcmp.lt.s32.totalorder %v129, 0
    %v131 = vsub.s32 0, %v129
    %v132 = vsel %vm130, %v131, %v129
    %v133 = vclz %v132
    %v134 = vsub.s32 %v133, 2
    %vm135 = vcmp.gt.s32.totalorder 0, %v134
    %v136 = vsel %vm135, 0, %v134
    %v137 = vsub.s32 32, %v136
    %v138 = vshll.u32 %v129, %v136
    %v139 = vshrl.u32 %v121, %v137
    %v140 = vor.u32 %v138, %v139
    %v141 = vsub.s32 4294967266, %v136
    %v142 = vadd.s32 %v141, 127
    %v143 = vshll.u32 %v142, 23
    %v144 = vor.u32 4788187, %v143
    %v145 = vand.u32 2147483647, %v144
    %v147 = vcvt.s32.f32 %v140
    %v148 = vmul.f32 %v147, %v145
    %v149 = vxor.u32 %v148, 2147483648
    %v150 = vsel %vm67, %v149, %v148
    %v151 = vsub.s32 4, %v127
    %v152 = vsel %vm67, %v151, %v127
    %v153 = vsel %vm66, %v64, %v150
    %v154 = vsel %vm66, 0, %v152
    %v155 = vcosq.f32.pop %v153
    %v156 = vsinq.f32.pop %v153
    %vm157 = vweird.f32 %v64
    %v158 = vadd.s32 %v154, 3
    %v159 = vand.u32 %v158, 3
    %vm160 = vcmp.lt.s32.totalorder %v159, 2
    %vm161 = vcmp.eq.s32.totalorder %v159, 0
    %v162 = vxor.u32 %v156, 2147483648
    %v163 = vsel %vm161, %v155, %v162
    %vm164 = vcmp.eq.s32.totalorder %v159, 2
    %v165 = vxor.u32 %v155, 2147483648
    %v166 = vsel %vm164, %v165, %v156
    %v167 = vsel %vm160, %v163, %v166
    %v168 = vsel %vm157, nan, %v167
    %v169 = vpack.c.bf16 %v168, %v168
    %v170 = vld [vmem:[%s2] sm:$0xf]
    %v171 = vld [vmem:[%s2 + $0x4] sm:$0xf]
    %v172 = vld [vmem:[%s2 + $0x8] sm:$0xf]
    %v173 = vld [vmem:[%s2 + $0xc] sm:$0xf]
    %v174 = vlaneseq
    %v175 = vshrl.u32 %v174, 7
    %v176 = vsub.s32 0, %v175
    %v177 = vrot.slane %v48, %v176
    %v182 = vunpack.c.l.b16 %v170
    %v183 = vunpack.c.l.b16 %v171
    %v184 = vunpack.c.l.b16 %v172
    %v185 = vunpack.c.l.b16 %v173
    %v186 = vpack.c.b16 %v183, %v182
    %v187 = vpack.c.b16 %v185, %v184
    %vm190 = vcmask 261120
    %v192 = vsel %vm190, %v169, 0
    %194 = vmatprep.subr.bf16.mxu0 0
    %195 = vmatpush1.bf16.msra.mxu0 %v186
    %196 = vmatprep.subr.bf16.mxu0 0
    %197 = vmatpush1.bf16.msra.mxu0 %v187
    %198 = vmatprep.subr.bf16.mxu0 0
    %199 = vmatpush1.bf16.msra.mxu0 0
    %200 = vmatprep.subr.bf16.mxu0 0
    %201 = vmatpush1.bf16.msra.mxu0 0
    %202 = vmatprep.subr.bf16.mxu0 0
    %203 = vmatpush1.bf16.msra.mxu0 0
    %204 = vmatprep.subr.bf16.mxu0 0
    %205 = vmatpush1.bf16.msra.mxu0 0
    %206 = vmatprep.subr.bf16.mxu0 0
    %207 = vmatpush1.bf16.msra.mxu0 0
    %208 = vmatprep.subr.bf16.mxu0 0
    %209 = vmatpush1.bf16.msra.mxu0 0
    %210 = vmatprep.subr.bf16.mxu0 0
    %211 = vmatpush1.bf16.msra.mxu0 0
    %212 = vmatprep.subr.bf16.mxu0 0
    %213 = vmatpush1.bf16.msra.mxu0 0
    %214 = vmatprep.subr.bf16.mxu0 0
    %215 = vmatpush1.bf16.msra.mxu0 0
    %216 = vmatprep.subr.bf16.mxu0 0
    %217 = vmatpush1.bf16.msra.mxu0 0
    %218 = vmatprep.subr.bf16.mxu0 0
    %219 = vmatpush1.bf16.msra.mxu0 0
    %220 = vmatprep.subr.bf16.mxu0 0
    %221 = vmatpush1.bf16.msra.mxu0 0
    %222 = vmatprep.subr.bf16.mxu0 0
    %223 = vmatpush1.bf16.msra.mxu0 0
    %224 = vmatprep.subr.bf16.mxu0 0
    %225 = vmatpush1.bf16.msra.mxu0 0
    %226 = vmatprep.mubr.bf16.mxu0 0
    %227 = vmatmul.mubr.bf16.gmra.mrb[0].mxu0 %v192
    %v228 = vpop.f32.mrb[0].mxu0
    %v229 = vadd.f32 %v177, %v228
    %v230 = vpop.f32.mrb[0].mxu0
    %v231 = vpop.f32.mrb[0].mxu0
    %v232 = vpop.f32.mrb[0].mxu0
    %233 = vdwg.mxu0
    %v234 = vxor.u32 %v229, 2147483648
    %v235 = vmul.f32 %v234, 1.442695
    %v236 = vpow.pop %v235
    %v237 = vadd.f32 %v236, 1.0
    %v238 = vrcp.pop %v237
    %v239 = vmul.f32 1.0, %v238
    %v240 = vmul.f32 %v229, %v239
    %v241 = vpack.c.bf16 %v240, %v240
    %v242 = vld [vmem:[#allocation5] sm:$0xf]
    %v243 = vld [vmem:[#allocation5 + $0x4] sm:$0xf]
    %v244 = vld [vmem:[#allocation5 + $0x8] sm:$0xf]
    %v245 = vld [vmem:[#allocation5 + $0xc] sm:$0xf]
    %v246 = vlaneseq
    %v247 = vshrl.u32 %v246, 7
    %v248 = vsub.s32 0, %v247
    %v249 = vrot.slane %v49, %v248
    %v254 = vunpack.c.l.b16 %v242
    %v255 = vunpack.c.l.b16 %v243
    %v256 = vunpack.c.l.b16 %v244
    %v257 = vunpack.c.l.b16 %v245
    %v258 = vpack.c.b16 %v255, %v254
    %v259 = vpack.c.b16 %v257, %v256
    %v263 = vsel %vm190, %v241, 0
    %265 = vmatprep.subr.bf16.mxu0 0
    %266 = vmatpush1.bf16.msra.mxu0 %v258
    %267 = vmatprep.subr.bf16.mxu0 0
    %268 = vmatpush1.bf16.msra.mxu0 %v259
    %269 = vmatprep.subr.bf16.mxu0 0
    %270 = vmatpush1.bf16.msra.mxu0 0
    %271 = vmatprep.subr.bf16.mxu0 0
    %272 = vmatpush1.bf16.msra.mxu0 0
    %273 = vmatprep.subr.bf16.mxu0 0
    %274 = vmatpush1.bf16.msra.mxu0 0
    %275 = vmatprep.subr.bf16.mxu0 0
    %276 = vmatpush1.bf16.msra.mxu0 0
    %277 = vmatprep.subr.bf16.mxu0 0
    %278 = vmatpush1.bf16.msra.mxu0 0
    %279 = vmatprep.subr.bf16.mxu0 0
    %280 = vmatpush1.bf16.msra.mxu0 0
    %281 = vmatprep.subr.bf16.mxu0 0
    %282 = vmatpush1.bf16.msra.mxu0 0
    %283 = vmatprep.subr.bf16.mxu0 0
    %284 = vmatpush1.bf16.msra.mxu0 0
    %285 = vmatprep.subr.bf16.mxu0 0
    %286 = vmatpush1.bf16.msra.mxu0 0
    %287 = vmatprep.subr.bf16.mxu0 0
    %288 = vmatpush1.bf16.msra.mxu0 0
    %289 = vmatprep.subr.bf16.mxu0 0
    %290 = vmatpush1.bf16.msra.mxu0 0
    %291 = vmatprep.subr.bf16.mxu0 0
    %292 = vmatpush1.bf16.msra.mxu0 0
    %293 = vmatprep.subr.bf16.mxu0 0
    %294 = vmatpush1.bf16.msra.mxu0 0
    %295 = vmatprep.subr.bf16.mxu0 0
    %296 = vmatpush1.bf16.msra.mxu0 0
    %297 = vmatprep.mubr.bf16.mxu0 0
    %298 = vmatmul.mubr.bf16.gmra.mrb[0].mxu0 %v263
    %v299 = vpop.f32.mrb[0].mxu0
    %v300 = vadd.f32 %v249, %v299
    %v301 = vpop.f32.mrb[0].mxu0
    %v302 = vpop.f32.mrb[0].mxu0
    %v303 = vpop.f32.mrb[0].mxu0
    %304 = vdwg.mxu0
    %305 = vst.msk [vmem:[#allocation7] sm:$0xff] %vm190, %v300
    // Predicated region
    $region26: #{tpu_custom_call.1} parent=1 // pred_check
      _
    $region27: #{tpu_custom_call.1} parent=1 // pred_check_branch
      %307 = sbr.rel (0) target = $region29
    $region28: #{tpu_custom_call.1} parent=1 // pred_region
      %s309 = ssub.s32 128, 128
      %310 = vsyncadd [#allocation4], %s309
      %s312 = sshll.u32 [#allocation7], 4
      %s313 = int_to_ptr.vmem [resolvable:$true] %s312
      %315 = dma.vmem_to_hbm [thread:$0]  %s313, 128, %s4, [#allocation4]
    $region29: #{tpu_custom_call.1} parent=1 // pred_fallthru
      _
    // Predicated region
    $region30: #{tpu_custom_call.1} parent=1 // pred_check
      _
    $region31: #{tpu_custom_call.1} parent=1 // pred_check_branch
      %317 = sbr.rel (0) target = $region33
    $region32: #{tpu_custom_call.1} parent=1 // pred_region
      %318 = dma.done [#allocation4], 128
    $region33: #{tpu_custom_call.1} parent=1 // pred_fallthru
      _
    %319 = vsyncpa [#allocation3], 1
    %320 = vsyncpa [#allocation6], 1
    %321 = vsyncpa [#allocation4], 1

</llo_original>
